<compile_context>
chip_gen: v7x
topology: tpu7x:2x2x1
jax: 0.10.0
libtpu: 0.0.40
codegen_flags: <defaults>
</compile_context>

<pallas_src>
import jax
import jax.numpy as jnp
from jax.experimental import pallas as pl
from jax.experimental.pallas import tpu as pltpu


# Keep one tile <= ~2 MiB: with double-buffered input + output (4 live tile
# buffers) this stays well under every generation's default scoped-VMEM limit.
_MAX_TILE_BYTES = 2 * 1024 * 1024


def _identity_kernel(x_ref, o_ref):
    # Hot path: straight VMEM load + store of one lane-dense tile.
    o_ref[...] = x_ref[...]


def _pick_lane_dense_cols(total: int):
    # Prefer a last dim that is a large multiple of 128 so stores are
    # full-vreg (no vst.msk); return None if the total size doesn't divide.
    for c in (4096, 2048, 1024, 512, 256, 128):
        if total % c == 0:
            return c
    return None


@jax.jit
def identity(x: jax.Array) -> jax.Array:
    """Pallas implementation of `Identity.forward`: returns x unchanged.

    NOTE: in production the fastest Identity is simply `return x`; the Pallas
    copy below exists to exercise the kernel path and is structured to run at
    the HBM roofline.
    """
    orig_shape = x.shape
    total = x.size
    if total == 0:
        return x

    # ---- build a lane-dense 2D view --------------------------------------
    if x.ndim == 0:
        x2d = x.reshape(1, 1)
    else:
        cols = _pick_lane_dense_cols(total)
        if cols is not None:
            x2d = x.reshape(-1, cols)
        else:
            # Fallback: keep the original last dim (correct, just less dense).
            x2d = x.reshape(-1, orig_shape[-1])

    rows, cols = x2d.shape
    itemsize = jnp.dtype(x2d.dtype).itemsize
    nbytes = rows * cols * itemsize

    # ---- choose a row tile that respects the VMEM budget ------------------
    tm_max = max(8, (_MAX_TILE_BYTES // max(1, cols * itemsize)) // 8 * 8)
    if rows <= tm_max:
        tm = rows                      # full-extent block: always legal
        grid = (1,)
    else:
        tm = tm_max                    # multiple of 8 sublanes
        grid = (pl.cdiv(rows, tm),)    # ragged last tile is masked by Pallas

    out2d = pl.pallas_call(
        _identity_kernel,
        out_shape=jax.ShapeDtypeStruct((rows, cols), x2d.dtype),
        grid=grid,
        in_specs=[pl.BlockSpec((tm, cols), lambda i: (i, 0))],
        out_specs=pl.BlockSpec((tm, cols), lambda i: (i, 0)),
        # Let XLA reuse the input buffer for the output (copy is in-place-safe).
        input_output_aliases={0: 0},
        compiler_params=pltpu.CompilerParams(
            # Tiles are independent -> shard across both TCs on v7x.
            dimension_semantics=("parallel",),
        ),
        cost_estimate=pl.CostEstimate(
            flops=0, transcendentals=0, bytes_accessed=2 * nbytes),
    )(x2d)

    return out2d.reshape(orig_shape)


if __name__ == "__main__":
    key = jax.random.PRNGKey(0)
    # NCHW input, consistent with typical conv-net usage of Identity.
    x = jax.random.normal(key, (2, 4, 16, 16), dtype=jnp.float32)

    y = identity(x)
    jax.block_until_ready(y)

    assert y.shape == x.shape, (y.shape, x.shape)
    assert y.dtype == x.dtype, (y.dtype, x.dtype)
    assert bool(jnp.all(y == x)), "Identity kernel did not reproduce input exactly"

    print("KERNEL_OK")
</pallas_src>

<mosaic_0001>
module attributes {stable_mosaic.version = 11 : i64} {
  func.func @_identity_kernel(%arg0: i32, %arg1: memref<1x2048xf32, #tpu.memory_space<vmem>>, %arg2: memref<1x2048xf32, #tpu.memory_space<vmem>>) attributes {dimension_semantics = [#tpu.dimension_semantics<parallel>], iteration_bounds = array<i64: 1>, scalar_prefetch = 0 : i64, scratch_operands = 0 : i64, tpu.core_type = #tpu.core_type<tc>, window_params = [{transform_indices = @transform_0, window_bounds = array<i64: 1, 2048>}, {transform_indices = @transform_1, window_bounds = array<i64: 1, 2048>}]} {
    %c0 = arith.constant 0 : index
    %c0_0 = arith.constant 0 : index
    %0 = vector.load %arg1[%c0, %c0_0] : memref<1x2048xf32, #tpu.memory_space<vmem>>, vector<1x2048xf32>
    %c0_1 = arith.constant 0 : index
    %c0_2 = arith.constant 0 : index
    %1 = vector.load %arg2[%c0_1, %c0_2] : memref<1x2048xf32, #tpu.memory_space<vmem>>, vector<1x2048xf32>
    tpu.vector_store %arg2[%c0_1, %c0_2], %0 {strides = array<i32>} : memref<1x2048xf32, #tpu.memory_space<vmem>>, vector<1x2048xf32>,
    return
  }
  func.func @transform_0(%arg0: i32) -> (i32, i32) {
    %c0_i32 = arith.constant 0 : i32
    %c0_i32_0 = arith.constant 0 : i32
    return %arg0, %c0_i32 : i32, i32
  }
  func.func @transform_1(%arg0: i32) -> (i32, i32) {
    %c0_i32 = arith.constant 0 : i32
    %c0_i32_0 = arith.constant 0 : i32
    return %arg0, %c0_i32 : i32, i32
  }
}

</mosaic_0001>

<llo_original>
// kernel: identity.1
$region0: #{identity.1}
  #allocation0 [shape = 'u32[]', space=smem, size = 0x4, offset = 0x4, fixed_abs, tag = 'smem constant byte address 0x4 - core index']
  #allocation1 [shape = 'u32[144,128]{1,0:T(1,128)}', space=vmem, size = 0x12000, scoped, tag = 'internal scratch']
  %s0 = inlined_call_operand.vmem [shape: f32[1,2048], index: 0, kind: input, shape index: {}, may-alias: {0,1}]
  %s1 = inlined_call_operand.vmem [shape: f32[1,2048], index: 1, kind: output, shape index: {}, may-alias: {0,1}]
  %s2 = sld [smem:[#allocation0]]
  $region14: #{identity.1} parent=0
    _
  %s4 = ssub.s32 1, %s2
  %s5 = scalar_select 0, %s4, %s2
  // Predicated region
  $region2: #{identity.1} parent=0 // pred_check
    _
  $region3: #{identity.1} parent=0 // pred_check_branch
    %7 = sbr.rel (0) target = $region5
  $region4: #{identity.1} parent=0 // pred_region
    _
  $region5: #{identity.1} parent=0 // pred_fallthru
    _
  %v8 = vld [vmem:[%s0] sm:$0xff]
  %v9 = vld [vmem:[%s0 + $0x8] sm:$0xff]
  %10 = vst [vmem:[%s1] sm:$0xff] %v8
  %11 = vst [vmem:[%s1 + $0x8] sm:$0xff] %v9
  // Predicated region
  $region6: #{identity.1} parent=0 // pred_check
    _
  $region7: #{identity.1} parent=0 // pred_check_branch
    %13 = sbr.rel (0) target = $region9
  $region8: #{identity.1} parent=0 // pred_region
    _
  $region9: #{identity.1} parent=0 // pred_fallthru
    _
  // Predicated region
  $region10: #{identity.1} parent=0 // pred_check
    _
  $region11: #{identity.1} parent=0 // pred_check_branch
    %15 = sbr.rel (0) target = $region13
  $region12: #{identity.1} parent=0 // pred_region
    _
  $region13: #{identity.1} parent=0 // pred_fallthru
    _

</llo_original>
